<compile_context>
chip_gen: v7x
topology: tpu7x:2x2x1
jax: 0.10.0
libtpu: 0.0.40
codegen_flags: <defaults>
</compile_context>

<pallas_src>
import functools

import jax
import jax.numpy as jnp
from jax import lax
from jax.experimental import pallas as pl
from jax.experimental.pallas import tpu as pltpu


_VMEM_BUDGET_BYTES = 40 * 1024 * 1024   # in + out slabs, double-buffered (4 live copies)
_VMEM_LIMIT_BYTES = 48 * 1024 * 1024    # safe on v5e/v6e (128 MiB) and v7x (64 MiB) VMEM


def _remove_self_loop_kernel(adj_ref, out_ref, *, tile_m):
    blk = adj_ref[...]                                                  # [tile_m, N]
    rows = lax.broadcasted_iota(jnp.int32, blk.shape, 0) + pl.program_id(0) * tile_m
    cols = lax.broadcasted_iota(jnp.int32, blk.shape, 1)
    out_ref[...] = jnp.where(rows == cols, jnp.array(0, blk.dtype), blk)


def _remove_self_loop_diag_kernel(adj_ref, out_ref):
    blk = adj_ref[...]                                                  # [t, t] diagonal block
    rows = lax.broadcasted_iota(jnp.int32, blk.shape, 0)
    cols = lax.broadcasted_iota(jnp.int32, blk.shape, 1)
    out_ref[...] = jnp.where(rows == cols, jnp.array(0, blk.dtype), blk)


def remove_self_loop(adj, tile_m=None):
    """RemoveSelfLoop.forward(adj) for a dense adjacency: adj with its diagonal zeroed."""
    # TODO(synk): the torch.sparse COO branch (index filtering + sparse_coo_tensor output)
    # has no dense-array Pallas equivalent; only the dense adjacency path is implemented.
    N, M = adj.shape
    assert N == M, "adjacency must be square"
    itemsize = jnp.dtype(adj.dtype).itemsize
    if tile_m is None:
        # Largest (8-aligned) row tile such that the double-buffered input slab plus the
        # double-buffered output slab fit the VMEM budget: 4 * tile_m * N * itemsize.
        cap = max(8, _VMEM_BUDGET_BYTES // (4 * N * itemsize))
        tile_m = next((t for t in (2048, 1024, 512, 256, 128, 64, 32, 16, 8)
                       if t <= cap and N % t == 0), N)
    kernel = functools.partial(_remove_self_loop_kernel, tile_m=tile_m)
    return pl.pallas_call(
        kernel,
        out_shape=jax.ShapeDtypeStruct((N, N), adj.dtype),
        grid=(N // tile_m,) if N % tile_m == 0 else (1,),
        in_specs=[pl.BlockSpec((tile_m, N), lambda i: (i, 0))],
        out_specs=pl.BlockSpec((tile_m, N), lambda i: (i, 0)),
        compiler_params=pltpu.CompilerParams(
            dimension_semantics=("parallel",),
            vmem_limit_bytes=_VMEM_LIMIT_BYTES,
        ),
    )(adj)


def remove_self_loop_inplace(adj, diag_tile=None):
    """Aliased variant: only the N/t diagonal [t, t] blocks are read and rewritten; the
    off-diagonal data is carried through the input/output alias. Zero-copy (true in-place)
    when the caller donates adj, e.g. jax.jit(remove_self_loop_inplace, donate_argnums=0)."""
    N, M = adj.shape
    assert N == M, "adjacency must be square"
    if diag_tile is None:
        diag_tile = next((t for t in (512, 256, 128) if N % t == 0), None)
    if diag_tile is None or N % diag_tile:
        # N not tileable into (8,128)-aligned diagonal blocks: fall back to the dense kernel.
        return remove_self_loop(adj)
    return pl.pallas_call(
        _remove_self_loop_diag_kernel,
        out_shape=jax.ShapeDtypeStruct((N, N), adj.dtype),
        grid=(N // diag_tile,),
        in_specs=[pl.BlockSpec((diag_tile, diag_tile), lambda i: (i, i))],
        out_specs=pl.BlockSpec((diag_tile, diag_tile), lambda i: (i, i)),
        input_output_aliases={0: 0},
        compiler_params=pltpu.CompilerParams(dimension_semantics=("parallel",)),
    )(adj)


def _reference(adj):
    """Pure-JAX mirror of the torch dense path: adj - diag(diag(adj))."""
    return adj - jnp.diag(jnp.diag(adj))


if __name__ == "__main__":
    key = jax.random.PRNGKey(0)
    N = 256
    adj = jax.random.uniform(key, (N, N), dtype=jnp.float32)
    ref = _reference(adj)

    # Functional dense kernel (auto tile -> one full-width lane-dense slab).
    out = jax.block_until_ready(remove_self_loop(adj))
    assert out.shape == (N, N) and out.dtype == adj.dtype
    assert bool(jnp.all(jnp.diag(out) == 0.0))
    assert jnp.allclose(out, ref)

    # Same kernel with an explicit smaller tile to exercise the multi-step 'parallel' grid.
    out_tiled = jax.block_until_ready(remove_self_loop(adj, tile_m=64))
    assert jnp.allclose(out_tiled, ref)

    # Aliased diagonal-blocks-only fast path (donated buffer -> in-place, O(N*t) traffic).
    inplace_fn = jax.jit(remove_self_loop_inplace, donate_argnums=0)
    out_inplace = jax.block_until_ready(inplace_fn(adj + 0.0))
    assert jnp.allclose(out_inplace, ref)

    print("KERNEL_OK")
</pallas_src>

<mosaic_0001>
module attributes {stable_mosaic.version = 11 : i64} {
  func.func @_remove_self_loop_kernel(%arg0: i32, %arg1: memref<256x256xf32, #tpu.memory_space<vmem>>, %arg2: memref<256x256xf32, #tpu.memory_space<vmem>>) attributes {dimension_semantics = [#tpu.dimension_semantics<parallel>], iteration_bounds = array<i64: 1>, scalar_prefetch = 0 : i64, scratch_operands = 0 : i64, tpu.core_type = #tpu.core_type<tc>, window_params = [{transform_indices = @transform_0, window_bounds = array<i64: 256, 256>}, {transform_indices = @transform_1, window_bounds = array<i64: 256, 256>}]} {
    %c0 = arith.constant 0 : index
    %c0_0 = arith.constant 0 : index
    %0 = vector.load %arg1[%c0, %c0_0] : memref<256x256xf32, #tpu.memory_space<vmem>>, vector<256x256xf32>
    %1 = tpu.iota {dimensions = array<i32: 0>} : vector<256x256xi32>
    %c256_i32 = arith.constant 256 : i32
    %2 = arith.muli %arg0, %c256_i32 : i32
    %3 = vector.broadcast %2 : i32 to vector<256x256xi32>
    %4 = arith.addi %1, %3 : vector<256x256xi32>
    %5 = tpu.iota {dimensions = array<i32: 1>} : vector<256x256xi32>
    %6 = arith.cmpi eq, %4, %5 : vector<256x256xi32>
    %cst = arith.constant 0.000000e+00 : f32
    %7 = vector.broadcast %cst : f32 to vector<256x256xf32>
    %8 = arith.select %6, %7, %0 : vector<256x256xi1>, vector<256x256xf32>
    %c0_1 = arith.constant 0 : index
    %c0_2 = arith.constant 0 : index
    %9 = vector.load %arg2[%c0_1, %c0_2] : memref<256x256xf32, #tpu.memory_space<vmem>>, vector<256x256xf32>
    tpu.vector_store %arg2[%c0_1, %c0_2], %8 {strides = array<i32>} : memref<256x256xf32, #tpu.memory_space<vmem>>, vector<256x256xf32>,
    return
  }
  func.func @transform_0(%arg0: i32) -> (i32, i32) {
    %c0_i32 = arith.constant 0 : i32
    %c0_i32_0 = arith.constant 0 : i32
    return %arg0, %c0_i32 : i32, i32
  }
  func.func @transform_1(%arg0: i32) -> (i32, i32) {
    %c0_i32 = arith.constant 0 : i32
    %c0_i32_0 = arith.constant 0 : i32
    return %arg0, %c0_i32 : i32, i32
  }
}

</mosaic_0001>

<llo_original>
// kernel: tpu_custom_call.1
$region0: #{tpu_custom_call.1}
  #allocation0 [shape = 'u32[]', space=smem, size = 0x4, offset = 0x4, fixed_abs, tag = 'smem constant byte address 0x4 - core index']
  #allocation1 [shape = 'u32[144,128]{1,0:T(1,128)}', space=vmem, size = 0x12000, scoped, tag = 'internal scratch']
  %s0 = inlined_call_operand.hbm [shape: f32[256,256], index: 0, kind: input, shape index: {}]
  %s1 = inlined_call_operand.hbm [shape: f32[256,256], index: 1, kind: output, shape index: {}]
  %s2 = sld [smem:[#allocation0]]
  $region18: #{tpu_custom_call.1} parent=0
    _
  %s4 = ssub.s32 1, %s2
  %s5 = scalar_select 0, %s4, %s2
  $region1: #{tpu_custom_call.1} parent=0
    #allocation2 [shape = 'u8[262144]{0}', space=vmem, size = 0x40000, scoped, tag = 'input window, operand 0, single buffered']
    #allocation3 [shape = 's32[1]{0}', space=sflag, size = 0x4, scoped, tag = 'scoped memory for tpu_custom_call.1']
    #allocation4 [shape = 's32[1]{0}', space=sflag, size = 0x4, scoped, tag = 'scoped memory for tpu_custom_call.1']
    #allocation5 [shape = 'u8[262144]{0}', space=vmem, size = 0x40000, scoped, tag = 'output window, operand 0, single buffered']
    %6 = vsyncpa [#allocation3], 0
    %7 = vsyncpa [#allocation4], 0
    // Predicated region
    $region2: #{tpu_custom_call.1} parent=1 // pred_check
      _
    $region3: #{tpu_custom_call.1} parent=1 // pred_check_branch
      %9 = sbr.rel (0) target = $region5
    $region4: #{tpu_custom_call.1} parent=1 // pred_region
      %s11 = ssub.s32 8192, 8192
      %12 = vsyncadd [#allocation3], %s11
      %s13 = sshll.u32 [#allocation2], 4
      %s14 = int_to_ptr.vmem [resolvable:$true] %s13
      %19 = dma.hbm_to_vmem [thread:$0]  %s0, 8192, %s14, [#allocation3], 256, 256, 16
    $region5: #{tpu_custom_call.1} parent=1 // pred_fallthru
      _
    // Predicated region
    $region6: #{tpu_custom_call.1} parent=1 // pred_check
      _
    $region7: #{tpu_custom_call.1} parent=1 // pred_check_branch
      %21 = sbr.rel (0) target = $region9
    $region8: #{tpu_custom_call.1} parent=1 // pred_region
      %22 = dma.done [#allocation3], 8192
    $region9: #{tpu_custom_call.1} parent=1 // pred_fallthru
      _
    %v23 = vld [vmem:[#allocation2] sm:$0xff]
    %v24 = vld [vmem:[#allocation2 + $0x8] sm:$0xff]
    %v25 = vld [vmem:[#allocation2 + $0x10] sm:$0xff]
    %v26 = vld [vmem:[#allocation2 + $0x18] sm:$0xff]
    %v27 = vld [vmem:[#allocation2 + $0x20] sm:$0xff]
    %v28 = vld [vmem:[#allocation2 + $0x28] sm:$0xff]
    %v29 = vld [vmem:[#allocation2 + $0x30] sm:$0xff]
    %v30 = vld [vmem:[#allocation2 + $0x38] sm:$0xff]
    %v31 = vld [vmem:[#allocation2 + $0x40] sm:$0xff]
    %v32 = vld [vmem:[#allocation2 + $0x48] sm:$0xff]
    %v33 = vld [vmem:[#allocation2 + $0x50] sm:$0xff]
    %v34 = vld [vmem:[#allocation2 + $0x58] sm:$0xff]
    %v35 = vld [vmem:[#allocation2 + $0x60] sm:$0xff]
    %v36 = vld [vmem:[#allocation2 + $0x68] sm:$0xff]
    %v37 = vld [vmem:[#allocation2 + $0x70] sm:$0xff]
    %v38 = vld [vmem:[#allocation2 + $0x78] sm:$0xff]
    %v39 = vld [vmem:[#allocation2 + $0x80] sm:$0xff]
    %v40 = vld [vmem:[#allocation2 + $0x88] sm:$0xff]
    %v41 = vld [vmem:[#allocation2 + $0x90] sm:$0xff]
    %v42 = vld [vmem:[#allocation2 + $0x98] sm:$0xff]
    %v43 = vld [vmem:[#allocation2 + $0xa0] sm:$0xff]
    %v44 = vld [vmem:[#allocation2 + $0xa8] sm:$0xff]
    %v45 = vld [vmem:[#allocation2 + $0xb0] sm:$0xff]
    %v46 = vld [vmem:[#allocation2 + $0xb8] sm:$0xff]
    %v47 = vld [vmem:[#allocation2 + $0xc0] sm:$0xff]
    %v48 = vld [vmem:[#allocation2 + $0xc8] sm:$0xff]
    %v49 = vld [vmem:[#allocation2 + $0xd0] sm:$0xff]
    %v50 = vld [vmem:[#allocation2 + $0xd8] sm:$0xff]
    %v51 = vld [vmem:[#allocation2 + $0xe0] sm:$0xff]
    %v52 = vld [vmem:[#allocation2 + $0xe8] sm:$0xff]
    %v53 = vld [vmem:[#allocation2 + $0xf0] sm:$0xff]
    %v54 = vld [vmem:[#allocation2 + $0xf8] sm:$0xff]
    %v55 = vld [vmem:[#allocation2 + $0x100] sm:$0xff]
    %v56 = vld [vmem:[#allocation2 + $0x108] sm:$0xff]
    %v57 = vld [vmem:[#allocation2 + $0x110] sm:$0xff]
    %v58 = vld [vmem:[#allocation2 + $0x118] sm:$0xff]
    %v59 = vld [vmem:[#allocation2 + $0x120] sm:$0xff]
    %v60 = vld [vmem:[#allocation2 + $0x128] sm:$0xff]
    %v61 = vld [vmem:[#allocation2 + $0x130] sm:$0xff]
    %v62 = vld [vmem:[#allocation2 + $0x138] sm:$0xff]
    %v63 = vld [vmem:[#allocation2 + $0x140] sm:$0xff]
    %v64 = vld [vmem:[#allocation2 + $0x148] sm:$0xff]
    %v65 = vld [vmem:[#allocation2 + $0x150] sm:$0xff]
    %v66 = vld [vmem:[#allocation2 + $0x158] sm:$0xff]
    %v67 = vld [vmem:[#allocation2 + $0x160] sm:$0xff]
    %v68 = vld [vmem:[#allocation2 + $0x168] sm:$0xff]
    %v69 = vld [vmem:[#allocation2 + $0x170] sm:$0xff]
    %v70 = vld [vmem:[#allocation2 + $0x178] sm:$0xff]
    %v71 = vld [vmem:[#allocation2 + $0x180] sm:$0xff]
    %v72 = vld [vmem:[#allocation2 + $0x188] sm:$0xff]
    %v73 = vld [vmem:[#allocation2 + $0x190] sm:$0xff]
    %v74 = vld [vmem:[#allocation2 + $0x198] sm:$0xff]
    %v75 = vld [vmem:[#allocation2 + $0x1a0] sm:$0xff]
    %v76 = vld [vmem:[#allocation2 + $0x1a8] sm:$0xff]
    %v77 = vld [vmem:[#allocation2 + $0x1b0] sm:$0xff]
    %v78 = vld [vmem:[#allocation2 + $0x1b8] sm:$0xff]
    %v79 = vld [vmem:[#allocation2 + $0x1c0] sm:$0xff]
    %v80 = vld [vmem:[#allocation2 + $0x1c8] sm:$0xff]
    %v81 = vld [vmem:[#allocation2 + $0x1d0] sm:$0xff]
    %v82 = vld [vmem:[#allocation2 + $0x1d8] sm:$0xff]
    %v83 = vld [vmem:[#allocation2 + $0x1e0] sm:$0xff]
    %v84 = vld [vmem:[#allocation2 + $0x1e8] sm:$0xff]
    %v85 = vld [vmem:[#allocation2 + $0x1f0] sm:$0xff]
    %v86 = vld [vmem:[#allocation2 + $0x1f8] sm:$0xff]
    %v87 = vlaneseq
    %v88 = vshrl.u32 %v87, 7
    %v89 = vadd.s32 %v88, 8
    %v90 = vadd.s32 %v88, 16
    %v91 = vadd.s32 %v88, 24
    %v92 = vadd.s32 %v88, 32
    %v93 = vadd.s32 %v88, 40
    %v94 = vadd.s32 %v88, 48
    %v95 = vadd.s32 %v88, 56
    %v96 = vadd.s32 %v88, 64
    %v97 = vadd.s32 %v88, 72
    %v98 = vadd.s32 %v88, 80
    %v99 = vadd.s32 %v88, 88
    %v100 = vadd.s32 %v88, 96
    %v101 = vadd.s32 %v88, 104
    %v102 = vadd.s32 %v88, 112
    %v103 = vadd.s32 %v88, 120
    %v104 = vadd.s32 %v88, 128
    %v105 = vadd.s32 %v88, 136
    %v106 = vadd.s32 %v88, 144
    %v107 = vadd.s32 %v88, 152
    %v108 = vadd.s32 %v88, 160
    %v109 = vadd.s32 %v88, 168
    %v110 = vadd.s32 %v88, 176
    %v111 = vadd.s32 %v88, 184
    %v112 = vadd.s32 %v88, 192
    %v113 = vadd.s32 %v88, 200
    %v114 = vadd.s32 %v88, 208
    %v115 = vadd.s32 %v88, 216
    %v116 = vadd.s32 %v88, 224
    %v117 = vadd.s32 %v88, 232
    %v118 = vadd.s32 %v88, 240
    %v119 = vadd.s32 %v88, 248
    %s120 = smul.u32 0, 256
    %v121 = vstv %s120
    %v122 = vadd.s32 %v88, %v121
    %v123 = vadd.s32 %v89, %v121
    %v124 = vadd.s32 %v90, %v121
    %v125 = vadd.s32 %v91, %v121
    %v126 = vadd.s32 %v92, %v121
    %v127 = vadd.s32 %v93, %v121
    %v128 = vadd.s32 %v94, %v121
    %v129 = vadd.s32 %v95, %v121
    %v130 = vadd.s32 %v96, %v121
    %v131 = vadd.s32 %v97, %v121
    %v132 = vadd.s32 %v98, %v121
    %v133 = vadd.s32 %v99, %v121
    %v134 = vadd.s32 %v100, %v121
    %v135 = vadd.s32 %v101, %v121
    %v136 = vadd.s32 %v102, %v121
    %v137 = vadd.s32 %v103, %v121
    %v138 = vadd.s32 %v104, %v121
    %v139 = vadd.s32 %v105, %v121
    %v140 = vadd.s32 %v106, %v121
    %v141 = vadd.s32 %v107, %v121
    %v142 = vadd.s32 %v108, %v121
    %v143 = vadd.s32 %v109, %v121
    %v144 = vadd.s32 %v110, %v121
    %v145 = vadd.s32 %v111, %v121
    %v146 = vadd.s32 %v112, %v121
    %v147 = vadd.s32 %v113, %v121
    %v148 = vadd.s32 %v114, %v121
    %v149 = vadd.s32 %v115, %v121
    %v150 = vadd.s32 %v116, %v121
    %v151 = vadd.s32 %v117, %v121
    %v152 = vadd.s32 %v118, %v121
    %v153 = vadd.s32 %v119, %v121
    %v154 = vlaneseq
    %v155 = vand.u32 %v154, 127
    %v156 = vadd.s32 %v155, 128
    %vm157 = vcmp.eq.s32.totalorder %v122, %v155
    %vm158 = vcmp.eq.s32.totalorder %v122, %v156
    %vm159 = vcmp.eq.s32.totalorder %v123, %v155
    %vm160 = vcmp.eq.s32.totalorder %v123, %v156
    %vm161 = vcmp.eq.s32.totalorder %v124, %v155
    %vm162 = vcmp.eq.s32.totalorder %v124, %v156
    %vm163 = vcmp.eq.s32.totalorder %v125, %v155
    %vm164 = vcmp.eq.s32.totalorder %v125, %v156
    %vm165 = vcmp.eq.s32.totalorder %v126, %v155
    %vm166 = vcmp.eq.s32.totalorder %v126, %v156
    %vm167 = vcmp.eq.s32.totalorder %v127, %v155
    %vm168 = vcmp.eq.s32.totalorder %v127, %v156
    %vm169 = vcmp.eq.s32.totalorder %v128, %v155
    %vm170 = vcmp.eq.s32.totalorder %v128, %v156
    %vm171 = vcmp.eq.s32.totalorder %v129, %v155
    %vm172 = vcmp.eq.s32.totalorder %v129, %v156
    %vm173 = vcmp.eq.s32.totalorder %v130, %v155
    %vm174 = vcmp.eq.s32.totalorder %v130, %v156
    %vm175 = vcmp.eq.s32.totalorder %v131, %v155
    %vm176 = vcmp.eq.s32.totalorder %v131, %v156
    %vm177 = vcmp.eq.s32.totalorder %v132, %v155
    %vm178 = vcmp.eq.s32.totalorder %v132, %v156
    %vm179 = vcmp.eq.s32.totalorder %v133, %v155
    %vm180 = vcmp.eq.s32.totalorder %v133, %v156
    %vm181 = vcmp.eq.s32.totalorder %v134, %v155
    %vm182 = vcmp.eq.s32.totalorder %v134, %v156
    %vm183 = vcmp.eq.s32.totalorder %v135, %v155
    %vm184 = vcmp.eq.s32.totalorder %v135, %v156
    %vm185 = vcmp.eq.s32.totalorder %v136, %v155
    %vm186 = vcmp.eq.s32.totalorder %v136, %v156
    %vm187 = vcmp.eq.s32.totalorder %v137, %v155
    %vm188 = vcmp.eq.s32.totalorder %v137, %v156
    %vm189 = vcmp.eq.s32.totalorder %v138, %v155
    %vm190 = vcmp.eq.s32.totalorder %v138, %v156
    %vm191 = vcmp.eq.s32.totalorder %v139, %v155
    %vm192 = vcmp.eq.s32.totalorder %v139, %v156
    %vm193 = vcmp.eq.s32.totalorder %v140, %v155
    %vm194 = vcmp.eq.s32.totalorder %v140, %v156
    %vm195 = vcmp.eq.s32.totalorder %v141, %v155
    %vm196 = vcmp.eq.s32.totalorder %v141, %v156
    %vm197 = vcmp.eq.s32.totalorder %v142, %v155
    %vm198 = vcmp.eq.s32.totalorder %v142, %v156
    %vm199 = vcmp.eq.s32.totalorder %v143, %v155
    %vm200 = vcmp.eq.s32.totalorder %v143, %v156
    %vm201 = vcmp.eq.s32.totalorder %v144, %v155
    %vm202 = vcmp.eq.s32.totalorder %v144, %v156
    %vm203 = vcmp.eq.s32.totalorder %v145, %v155
    %vm204 = vcmp.eq.s32.totalorder %v145, %v156
    %vm205 = vcmp.eq.s32.totalorder %v146, %v155
    %vm206 = vcmp.eq.s32.totalorder %v146, %v156
    %vm207 = vcmp.eq.s32.totalorder %v147, %v155
    %vm208 = vcmp.eq.s32.totalorder %v147, %v156
    %vm209 = vcmp.eq.s32.totalorder %v148, %v155
    %vm210 = vcmp.eq.s32.totalorder %v148, %v156
    %vm211 = vcmp.eq.s32.totalorder %v149, %v155
    %vm212 = vcmp.eq.s32.totalorder %v149, %v156
    %vm213 = vcmp.eq.s32.totalorder %v150, %v155
    %vm214 = vcmp.eq.s32.totalorder %v150, %v156
    %vm215 = vcmp.eq.s32.totalorder %v151, %v155
    %vm216 = vcmp.eq.s32.totalorder %v151, %v156
    %vm217 = vcmp.eq.s32.totalorder %v152, %v155
    %vm218 = vcmp.eq.s32.totalorder %v152, %v156
    %vm219 = vcmp.eq.s32.totalorder %v153, %v155
    %vm220 = vcmp.eq.s32.totalorder %v153, %v156
    %v221 = vsel %vm157, 0.0, %v23
    %v222 = vsel %vm158, 0.0, %v24
    %v223 = vsel %vm159, 0.0, %v25
    %v224 = vsel %vm160, 0.0, %v26
    %v225 = vsel %vm161, 0.0, %v27
    %v226 = vsel %vm162, 0.0, %v28
    %v227 = vsel %vm163, 0.0, %v29
    %v228 = vsel %vm164, 0.0, %v30
    %v229 = vsel %vm165, 0.0, %v31
    %v230 = vsel %vm166, 0.0, %v32
    %v231 = vsel %vm167, 0.0, %v33
    %v232 = vsel %vm168, 0.0, %v34
    %v233 = vsel %vm169, 0.0, %v35
    %v234 = vsel %vm170, 0.0, %v36
    %v235 = vsel %vm171, 0.0, %v37
    %v236 = vsel %vm172, 0.0, %v38
    %v237 = vsel %vm173, 0.0, %v39
    %v238 = vsel %vm174, 0.0, %v40
    %v239 = vsel %vm175, 0.0, %v41
    %v240 = vsel %vm176, 0.0, %v42
    %v241 = vsel %vm177, 0.0, %v43
    %v242 = vsel %vm178, 0.0, %v44
    %v243 = vsel %vm179, 0.0, %v45
    %v244 = vsel %vm180, 0.0, %v46
    %v245 = vsel %vm181, 0.0, %v47
    %v246 = vsel %vm182, 0.0, %v48
    %v247 = vsel %vm183, 0.0, %v49
    %v248 = vsel %vm184, 0.0, %v50
    %v249 = vsel %vm185, 0.0, %v51
    %v250 = vsel %vm186, 0.0, %v52
    %v251 = vsel %vm187, 0.0, %v53
    %v252 = vsel %vm188, 0.0, %v54
    %v253 = vsel %vm189, 0.0, %v55
    %v254 = vsel %vm190, 0.0, %v56
    %v255 = vsel %vm191, 0.0, %v57
    %v256 = vsel %vm192, 0.0, %v58
    %v257 = vsel %vm193, 0.0, %v59
    %v258 = vsel %vm194, 0.0, %v60
    %v259 = vsel %vm195, 0.0, %v61
    %v260 = vsel %vm196, 0.0, %v62
    %v261 = vsel %vm197, 0.0, %v63
    %v262 = vsel %vm198, 0.0, %v64
    %v263 = vsel %vm199, 0.0, %v65
    %v264 = vsel %vm200, 0.0, %v66
    %v265 = vsel %vm201, 0.0, %v67
    %v266 = vsel %vm202, 0.0, %v68
    %v267 = vsel %vm203, 0.0, %v69
    %v268 = vsel %vm204, 0.0, %v70
    %v269 = vsel %vm205, 0.0, %v71
    %v270 = vsel %vm206, 0.0, %v72
    %v271 = vsel %vm207, 0.0, %v73
    %v272 = vsel %vm208, 0.0, %v74
    %v273 = vsel %vm209, 0.0, %v75
    %v274 = vsel %vm210, 0.0, %v76
    %v275 = vsel %vm211, 0.0, %v77
    %v276 = vsel %vm212, 0.0, %v78
    %v277 = vsel %vm213, 0.0, %v79
    %v278 = vsel %vm214, 0.0, %v80
    %v279 = vsel %vm215, 0.0, %v81
    %v280 = vsel %vm216, 0.0, %v82
    %v281 = vsel %vm217, 0.0, %v83
    %v282 = vsel %vm218, 0.0, %v84
    %v283 = vsel %vm219, 0.0, %v85
    %v284 = vsel %vm220, 0.0, %v86
    %285 = vst [vmem:[#allocation5] sm:$0xff] %v221
    %286 = vst [vmem:[#allocation5 + $0x8] sm:$0xff] %v222
    %287 = vst [vmem:[#allocation5 + $0x10] sm:$0xff] %v223
    %288 = vst [vmem:[#allocation5 + $0x18] sm:$0xff] %v224
    %289 = vst [vmem:[#allocation5 + $0x20] sm:$0xff] %v225
    %290 = vst [vmem:[#allocation5 + $0x28] sm:$0xff] %v226
    %291 = vst [vmem:[#allocation5 + $0x30] sm:$0xff] %v227
    %292 = vst [vmem:[#allocation5 + $0x38] sm:$0xff] %v228
    %293 = vst [vmem:[#allocation5 + $0x40] sm:$0xff] %v229
    %294 = vst [vmem:[#allocation5 + $0x48] sm:$0xff] %v230
    %295 = vst [vmem:[#allocation5 + $0x50] sm:$0xff] %v231
    %296 = vst [vmem:[#allocation5 + $0x58] sm:$0xff] %v232
    %297 = vst [vmem:[#allocation5 + $0x60] sm:$0xff] %v233
    %298 = vst [vmem:[#allocation5 + $0x68] sm:$0xff] %v234
    %299 = vst [vmem:[#allocation5 + $0x70] sm:$0xff] %v235
    %300 = vst [vmem:[#allocation5 + $0x78] sm:$0xff] %v236
    %301 = vst [vmem:[#allocation5 + $0x80] sm:$0xff] %v237
    %302 = vst [vmem:[#allocation5 + $0x88] sm:$0xff] %v238
    %303 = vst [vmem:[#allocation5 + $0x90] sm:$0xff] %v239
    %304 = vst [vmem:[#allocation5 + $0x98] sm:$0xff] %v240
    %305 = vst [vmem:[#allocation5 + $0xa0] sm:$0xff] %v241
    %306 = vst [vmem:[#allocation5 + $0xa8] sm:$0xff] %v242
    %307 = vst [vmem:[#allocation5 + $0xb0] sm:$0xff] %v243
    %308 = vst [vmem:[#allocation5 + $0xb8] sm:$0xff] %v244
    %309 = vst [vmem:[#allocation5 + $0xc0] sm:$0xff] %v245
    %310 = vst [vmem:[#allocation5 + $0xc8] sm:$0xff] %v246
    %311 = vst [vmem:[#allocation5 + $0xd0] sm:$0xff] %v247
    %312 = vst [vmem:[#allocation5 + $0xd8] sm:$0xff] %v248
    %313 = vst [vmem:[#allocation5 + $0xe0] sm:$0xff] %v249
    %314 = vst [vmem:[#allocation5 + $0xe8] sm:$0xff] %v250
    %315 = vst [vmem:[#allocation5 + $0xf0] sm:$0xff] %v251
    %316 = vst [vmem:[#allocation5 + $0xf8] sm:$0xff] %v252
    %317 = vst [vmem:[#allocation5 + $0x100] sm:$0xff] %v253
    %318 = vst [vmem:[#allocation5 + $0x108] sm:$0xff] %v254
    %319 = vst [vmem:[#allocation5 + $0x110] sm:$0xff] %v255
    %320 = vst [vmem:[#allocation5 + $0x118] sm:$0xff] %v256
    %321 = vst [vmem:[#allocation5 + $0x120] sm:$0xff] %v257
    %322 = vst [vmem:[#allocation5 + $0x128] sm:$0xff] %v258
    %323 = vst [vmem:[#allocation5 + $0x130] sm:$0xff] %v259
    %324 = vst [vmem:[#allocation5 + $0x138] sm:$0xff] %v260
    %325 = vst [vmem:[#allocation5 + $0x140] sm:$0xff] %v261
    %326 = vst [vmem:[#allocation5 + $0x148] sm:$0xff] %v262
    %327 = vst [vmem:[#allocation5 + $0x150] sm:$0xff] %v263
    %328 = vst [vmem:[#allocation5 + $0x158] sm:$0xff] %v264
    %329 = vst [vmem:[#allocation5 + $0x160] sm:$0xff] %v265
    %330 = vst [vmem:[#allocation5 + $0x168] sm:$0xff] %v266
    %331 = vst [vmem:[#allocation5 + $0x170] sm:$0xff] %v267
    %332 = vst [vmem:[#allocation5 + $0x178] sm:$0xff] %v268
    %333 = vst [vmem:[#allocation5 + $0x180] sm:$0xff] %v269
    %334 = vst [vmem:[#allocation5 + $0x188] sm:$0xff] %v270
    %335 = vst [vmem:[#allocation5 + $0x190] sm:$0xff] %v271
    %336 = vst [vmem:[#allocation5 + $0x198] sm:$0xff] %v272
    %337 = vst [vmem:[#allocation5 + $0x1a0] sm:$0xff] %v273
    %338 = vst [vmem:[#allocation5 + $0x1a8] sm:$0xff] %v274
    %339 = vst [vmem:[#allocation5 + $0x1b0] sm:$0xff] %v275
    %340 = vst [vmem:[#allocation5 + $0x1b8] sm:$0xff] %v276
    %341 = vst [vmem:[#allocation5 + $0x1c0] sm:$0xff] %v277
    %342 = vst [vmem:[#allocation5 + $0x1c8] sm:$0xff] %v278
    %343 = vst [vmem:[#allocation5 + $0x1d0] sm:$0xff] %v279
    %344 = vst [vmem:[#allocation5 + $0x1d8] sm:$0xff] %v280
    %345 = vst [vmem:[#allocation5 + $0x1e0] sm:$0xff] %v281
    %346 = vst [vmem:[#allocation5 + $0x1e8] sm:$0xff] %v282
    %347 = vst [vmem:[#allocation5 + $0x1f0] sm:$0xff] %v283
    %348 = vst [vmem:[#allocation5 + $0x1f8] sm:$0xff] %v284
    // Predicated region
    $region10: #{tpu_custom_call.1} parent=1 // pred_check
      _
    $region11: #{tpu_custom_call.1} parent=1 // pred_check_branch
      %350 = sbr.rel (0) target = $region13
    $region12: #{tpu_custom_call.1} parent=1 // pred_region
      %s352 = ssub.s32 8192, 8192
      %353 = vsyncadd [#allocation4], %s352
      %s354 = sshll.u32 [#allocation5], 4
      %s355 = int_to_ptr.vmem [resolvable:$true] %s354
      %360 = dma.vmem_to_hbm [thread:$0]  %s355, 8192, %s1, [#allocation4], 256, 256, 16
    $region13: #{tpu_custom_call.1} parent=1 // pred_fallthru
      _
    // Predicated region
    $region14: #{tpu_custom_call.1} parent=1 // pred_check
      _
    $region15: #{tpu_custom_call.1} parent=1 // pred_check_branch
      %362 = sbr.rel (0) target = $region17
    $region16: #{tpu_custom_call.1} parent=1 // pred_region
      %363 = dma.done [#allocation4], 8192
    $region17: #{tpu_custom_call.1} parent=1 // pred_fallthru
      _
    %364 = vsyncpa [#allocation3], 1
    %365 = vsyncpa [#allocation4], 1

</llo_original>
